<compile_context>
chip_gen: v5e
topology: v5e:2x2
jax: 0.10.0
libtpu: 0.0.40
codegen_flags: <defaults>
</compile_context>

<pallas_src>
import jax
import jax.numpy as jnp
from jax.experimental import pallas as pl
from jax.experimental.pallas import tpu as pltpu


def _round_up(n, m):
    return ((n + m - 1) // m) * m


def _cdiv(a, b):
    return (a + b - 1) // b


def _pad2d(a, rows, cols, dtype=None):
    r, c = a.shape
    a = jnp.pad(a, ((0, rows - r), (0, cols - c)))
    return a.astype(dtype) if dtype is not None else a


def _vmem_capacity_bytes():
    try:
        return int(pltpu.get_tpu_info().vmem_capacity_bytes)
    except Exception:
        return 64 * 1024 * 1024  # conservative default (v7x-sized)


def _resident_spec(block_shape, index_map):
    """BlockSpec for an operand whose block index never changes across the grid.

    Requests a single pipeline buffer (no pointless double buffering); falls back to
    a plain BlockSpec if this JAX build does not expose pipeline_mode/Buffered.
    """
    buffered = getattr(pl, "Buffered", None)
    if buffered is not None:
        try:
            return pl.BlockSpec(block_shape, index_map, pipeline_mode=buffered(1))
        except TypeError:
            pass
    return pl.BlockSpec(block_shape, index_map)


# ----------------------------------------------------------------------------- kernels

def _mlp_kernel_resident(x_ref, w1_ref, b1_ref, w2_ref, b2_ref, o_ref):
    # Layer 1: (tb, In_p) @ (In_p, H_p) on the MXU with f32 accumulation.
    h = jnp.dot(x_ref[...], w1_ref[...], preferred_element_type=jnp.float32)
    # Bias add + ReLU on full (lane-dense) vregs, in f32.
    h = jnp.maximum(h + b1_ref[...], 0.0)
    # Layer 2: (tb, H_p) @ (H_p, Out_p).
    y = jnp.dot(h.astype(w2_ref.dtype), w2_ref[...],
                preferred_element_type=jnp.float32)
    o_ref[...] = (y + b2_ref[...]).astype(o_ref.dtype)


def _mlp_kernel_htiled(x_ref, w1_ref, b1_ref, w2_ref, b2_ref, o_ref, acc_ref):
    # Grid: (batch tiles, hidden tiles); hidden axis is last and "arbitrary".
    j = pl.program_id(1)

    @pl.when(j == 0)
    def _():
        acc_ref[...] = jnp.zeros_like(acc_ref)

    h = jnp.dot(x_ref[...], w1_ref[...], preferred_element_type=jnp.float32)
    h = jnp.maximum(h + b1_ref[...], 0.0)
    acc_ref[...] += jnp.dot(h.astype(w2_ref.dtype), w2_ref[...],
                            preferred_element_type=jnp.float32)

    @pl.when(j == pl.num_programs(1) - 1)
    def _():
        o_ref[...] = (acc_ref[...] + b2_ref[...]).astype(o_ref.dtype)


# ----------------------------------------------------------------------------- wrappers

def prepare_params(w1, b1, w2, b2, *, use_bf16=True):
    """Pad / cast the parameters once (hoisted out of the per-call forward path).

    Zero padding is exact: padded x columns hit zero w1 rows, padded hidden lanes get
    zero weight columns + zero bias -> ReLU(0)=0 -> multiplied by zero w2 rows.
    """
    In, H = w1.shape
    H2, Out = w2.shape
    assert H == H2, "w1/w2 hidden dims mismatch"
    compute_dtype = jnp.bfloat16 if use_bf16 else w1.dtype
    In_p, H_p, Out_p = _round_up(In, 128), _round_up(H, 128), _round_up(Out, 128)

    w1_p = _pad2d(w1, In_p, H_p, compute_dtype)
    w2_p = _pad2d(w2, H_p, Out_p, compute_dtype)
    b1_p = _pad2d(jnp.asarray(b1).reshape(1, -1), 1, H_p, jnp.float32)
    b2_p = _pad2d(jnp.asarray(b2).reshape(1, -1), 1, Out_p, jnp.float32)

    meta = dict(In=In, H=H, Out=Out, In_p=In_p, H_p=H_p, Out_p=Out_p,
                compute_dtype=jnp.dtype(compute_dtype))
    return (w1_p, b1_p, w2_p, b2_p), meta


def _choose_batch_tile(B, block_b, row_align, min_tiles):
    # Balanced tiles so the last tile is not mostly padding.
    n_tiles = max(1, _cdiv(B, block_b))
    if min_tiles > 1 and B >= min_tiles * row_align:
        n_tiles = max(n_tiles, min_tiles)
    tb = _round_up(_cdiv(B, n_tiles), row_align)
    B_p = _round_up(B, tb)
    return tb, B_p


def mlp_forward_prepared(x, prepared, meta, *, block_b=512, block_h=512,
                         out_dtype=None, force_hidden_tiling=False):
    """2-layer MLP forward: relu(x @ w1 + b1) @ w2 + b2 with pre-padded params."""
    w1_p, b1_p, w2_p, b2_p = prepared
    In, Out = meta["In"], meta["Out"]
    In_p, H_p, Out_p = meta["In_p"], meta["H_p"], meta["Out_p"]
    cdt = jnp.dtype(meta["compute_dtype"])

    B = x.shape[0]
    assert x.shape[1] == In
    out_dtype = jnp.dtype(x.dtype) if out_dtype is None else jnp.dtype(out_dtype)
    out_isz = out_dtype.itemsize

    # bf16 packs 16 rows per sublane-packed vreg -> align batch tiles to 16.
    row_align = 16 if cdt.itemsize < 4 else 8

    vmem_cap = _vmem_capacity_bytes()
    weight_bytes = (In_p * H_p + H_p * Out_p) * cdt.itemsize
    bias_bytes = 8 * (H_p + Out_p) * 4

    # v7x has 2 TensorCores/chip: aim for >=2 grid steps along batch when B is large.
    min_tiles = 2 if B >= 256 else 1
    tb, B_p = _choose_batch_tile(B, block_b, row_align, min_tiles)

    use_htile = force_hidden_tiling or (weight_bytes + bias_bytes > vmem_cap // 2)

    if not use_htile:
        # Fully-resident weights, streamed x/out tiles.
        def est(tb_):
            return (2 * tb_ * In_p * cdt.itemsize       # x tiles (double buffered)
                    + 2 * tb_ * Out_p * out_isz          # out tiles (double buffered)
                    + weight_bytes + bias_bytes)         # resident (single buffered)

        while est(tb) > int(0.8 * vmem_cap) and tb > row_align:
            tb = max(row_align, _round_up(tb // 2, row_align))
            B_p = _round_up(B, tb)

        x_p = _pad2d(x, B_p, In_p, cdt)
        grid = (B_p // tb,)
        vmem_est = est(tb)
        flops = 2 * B_p * (In_p * H_p + H_p * Out_p)
        bytes_accessed = (B_p * In_p * cdt.itemsize + weight_bytes
                          + 4 * (H_p + Out_p) + B_p * Out_p * out_isz)

        out_p = pl.pallas_call(
            _mlp_kernel_resident,
            out_shape=jax.ShapeDtypeStruct((B_p, Out_p), out_dtype),
            grid_spec=pltpu.PrefetchScalarGridSpec(
                num_scalar_prefetch=0,
                grid=grid,
                in_specs=[
                    pl.BlockSpec((tb, In_p), lambda i: (i, 0)),        # x streams
                    _resident_spec((In_p, H_p), lambda i: (0, 0)),     # w1 resident
                    _resident_spec((1, H_p), lambda i: (0, 0)),        # b1 resident
                    _resident_spec((H_p, Out_p), lambda i: (0, 0)),    # w2 resident
                    _resident_spec((1, Out_p), lambda i: (0, 0)),      # b2 resident
                ],
                out_specs=pl.BlockSpec((tb, Out_p), lambda i: (i, 0)),
            ),
            compiler_params=pltpu.CompilerParams(
                dimension_semantics=("parallel",),
                vmem_limit_bytes=int(min(max(2 * vmem_est, 32 * 1024 * 1024),
                                         int(0.9 * vmem_cap))),
            ),
            cost_estimate=pl.CostEstimate(flops=flops, transcendentals=0,
                                          bytes_accessed=bytes_accessed),
        )(x_p, w1_p, b1_p, w2_p, b2_p)
    else:
        # Hidden-dim tiled fallback: weights stream in H slices, layer-2 accumulates
        # into a (tb, Out_p) f32 VMEM scratch; output stays resident across the H axis.
        # TODO(synk): also tile the input-feature dim for extremely large In.
        m = H_p // 128
        target = max(1, min(block_h, H_p) // 128)
        d = max(dd for dd in range(1, m + 1) if m % dd == 0 and dd <= target)
        th = 128 * d

        def est(tb_, th_):
            return (2 * tb_ * In_p * cdt.itemsize                 # x tiles
                    + 2 * (In_p * th_ + th_ * Out_p) * cdt.itemsize  # streamed weights
                    + 2 * tb_ * Out_p * out_isz                    # out tiles
                    + tb_ * Out_p * 4                              # f32 accumulator
                    + 8 * (th_ + Out_p) * 4)                       # bias tiles

        while est(tb, th) > int(0.8 * vmem_cap) and (tb > row_align or th > 128):
            if th > 128:
                dd = max(x_ for x_ in range(1, d) if d % x_ == 0)  # next smaller divisor
                d, th = dd, 128 * dd
            else:
                tb = max(row_align, _round_up(tb // 2, row_align))
                B_p = _round_up(B, tb)

        x_p = _pad2d(x, B_p, In_p, cdt)
        grid = (B_p // tb, H_p // th)
        vmem_est = est(tb, th)
        flops = 2 * B_p * (In_p * H_p + H_p * Out_p)
        bytes_accessed = ((B_p // tb) * 0 + B_p * In_p * cdt.itemsize
                          + (B_p // tb) * weight_bytes
                          + 4 * (H_p + Out_p) + B_p * Out_p * out_isz)

        out_p = pl.pallas_call(
            _mlp_kernel_htiled,
            out_shape=jax.ShapeDtypeStruct((B_p, Out_p), out_dtype),
            grid_spec=pltpu.PrefetchScalarGridSpec(
                num_scalar_prefetch=0,
                grid=grid,
                in_specs=[
                    pl.BlockSpec((tb, In_p), lambda i, j: (i, 0)),     # x (revisited over j)
                    pl.BlockSpec((In_p, th), lambda i, j: (0, j)),     # w1 H-slice
                    pl.BlockSpec((1, th), lambda i, j: (0, j)),        # b1 H-slice
                    pl.BlockSpec((th, Out_p), lambda i, j: (j, 0)),    # w2 H-slice
                    _resident_spec((1, Out_p), lambda i, j: (0, 0)),   # b2 resident
                ],
                out_specs=pl.BlockSpec((tb, Out_p), lambda i, j: (i, 0)),
                scratch_shapes=[pltpu.VMEM((tb, Out_p), jnp.float32)],
            ),
            compiler_params=pltpu.CompilerParams(
                dimension_semantics=("parallel", "arbitrary"),
                vmem_limit_bytes=int(min(max(2 * vmem_est, 32 * 1024 * 1024),
                                         int(0.9 * vmem_cap))),
            ),
            cost_estimate=pl.CostEstimate(flops=flops, transcendentals=0,
                                          bytes_accessed=bytes_accessed),
        )(x_p, w1_p, b1_p, w2_p, b2_p)

    # Slice padding back off.
    return out_p[:B, :Out]


def mlp_forward(x, w1, b1, w2, b2, *, use_bf16=True, **kw):
    """Convenience wrapper: pads params per call (prefer prepare_params for reuse)."""
    prepared, meta = prepare_params(w1, b1, w2, b2, use_bf16=use_bf16)
    return mlp_forward_prepared(x, prepared, meta, **kw)


def init_params(key, input_size, hidden_size, output_size, dtype=jnp.float32):
    # Mimic PyTorch nn.Linear default init: U(-1/sqrt(fan_in), 1/sqrt(fan_in)).
    k1, k2, k3, k4 = jax.random.split(key, 4)
    s1 = 1.0 / jnp.sqrt(input_size)
    s2 = 1.0 / jnp.sqrt(hidden_size)
    w1 = jax.random.uniform(k1, (input_size, hidden_size), dtype, -s1, s1)
    b1 = jax.random.uniform(k2, (1, hidden_size), dtype, -s1, s1)
    w2 = jax.random.uniform(k3, (hidden_size, output_size), dtype, -s2, s2)
    b2 = jax.random.uniform(k4, (1, output_size), dtype, -s2, s2)
    return w1, b1, w2, b2


if __name__ == "__main__":
    batch = 8
    input_size = 32
    hidden_size = 64
    output_size = 16

    key = jax.random.PRNGKey(0)
    kx, kp = jax.random.split(key)
    x = jax.random.normal(kx, (batch, input_size), jnp.float32)
    w1, b1, w2, b2 = init_params(kp, input_size, hidden_size, output_size)

    ref = jnp.maximum(x @ w1 + b1, 0.0) @ w2 + b2

    # Hoisted param prep (pad/cast once); per-call forward only pads x.
    prepared_bf16, meta_bf16 = prepare_params(w1, b1, w2, b2, use_bf16=True)
    out = mlp_forward_prepared(x, prepared_bf16, meta_bf16)
    jax.block_until_ready(out)
    assert out.shape == (batch, output_size)
    assert jnp.allclose(out, ref, atol=5e-2, rtol=5e-2), float(jnp.max(jnp.abs(out - ref)))

    # Exact-precision (f32) resident path.
    prepared_f32, meta_f32 = prepare_params(w1, b1, w2, b2, use_bf16=False)
    out_f32 = mlp_forward_prepared(x, prepared_f32, meta_f32)
    jax.block_until_ready(out_f32)
    assert jnp.allclose(out_f32, ref, atol=1e-5, rtol=1e-5)

    # Exercise the hidden-dim-tiled accumulator path (auto-selected when weights
    # would not fit resident, e.g. large models inside v7x's 64 MiB VMEM).
    out_ht = mlp_forward_prepared(x, prepared_f32, meta_f32,
                                  force_hidden_tiling=True, block_h=128)
    jax.block_until_ready(out_ht)
    assert jnp.allclose(out_ht, ref, atol=1e-5, rtol=1e-5)

    # Multi-step H accumulation check (H_p=256 split into two 128 slices).
    w1b, b1b, w2b, b2b = init_params(jax.random.PRNGKey(1), input_size, 256, output_size)
    ref_b = jnp.maximum(x @ w1b + b1b, 0.0) @ w2b + b2b
    prepared_b, meta_b = prepare_params(w1b, b1b, w2b, b2b, use_bf16=False)
    out_b = mlp_forward_prepared(x, prepared_b, meta_b,
                                 force_hidden_tiling=True, block_h=128)
    jax.block_until_ready(out_b)
    assert jnp.allclose(out_b, ref_b, atol=1e-5, rtol=1e-5)

    print("KERNEL_OK")
</pallas_src>

<mosaic_0001>
module attributes {stable_mosaic.version = 11 : i64} {
  func.func @_mlp_kernel_resident(%arg0: i32, %arg1: memref<16x128xbf16, #tpu.memory_space<vmem>>, %arg2: memref<128x128xbf16, #tpu.memory_space<vmem>>, %arg3: memref<1x128xf32, #tpu.memory_space<vmem>>, %arg4: memref<128x128xbf16, #tpu.memory_space<vmem>>, %arg5: memref<1x128xf32, #tpu.memory_space<vmem>>, %arg6: memref<16x128xf32, #tpu.memory_space<vmem>>) attributes {dimension_semantics = [#tpu.dimension_semantics<parallel>], iteration_bounds = array<i64: 1>, scalar_prefetch = 0 : i64, scratch_operands = 0 : i64, tpu.core_type = #tpu.core_type<tc>, window_params = [{transform_indices = @transform_0, window_bounds = array<i64: 16, 128>}, {pipeline_mode = #tpu.pipeline_mode<synchronous>, transform_indices = @transform_1, window_bounds = array<i64: 128, 128>}, {pipeline_mode = #tpu.pipeline_mode<synchronous>, transform_indices = @transform_2, window_bounds = array<i64: 1, 128>}, {pipeline_mode = #tpu.pipeline_mode<synchronous>, transform_indices = @transform_3, window_bounds = array<i64: 128, 128>}, {pipeline_mode = #tpu.pipeline_mode<synchronous>, transform_indices = @transform_4, window_bounds = array<i64: 1, 128>}, {transform_indices = @transform_5, window_bounds = array<i64: 16, 128>}]} {
    %c0 = arith.constant 0 : index
    %c0_0 = arith.constant 0 : index
    %0 = vector.load %arg1[%c0, %c0_0] : memref<16x128xbf16, #tpu.memory_space<vmem>>, vector<16x128xbf16>
    %c0_1 = arith.constant 0 : index
    %c0_2 = arith.constant 0 : index
    %1 = vector.load %arg2[%c0_1, %c0_2] : memref<128x128xbf16, #tpu.memory_space<vmem>>, vector<128x128xbf16>
    %cst = arith.constant dense<0.000000e+00> : vector<16x128xf32>
    %2 = tpu.matmul %0, %1, %cst {dimension_numbers = #tpu.dot_dimension_numbers<[1], [0], [0], [1], [0, 0, 1, 1], [], []>} : vector<16x128xbf16>, vector<128x128xbf16>, vector<16x128xf32> -> vector<16x128xf32>
    %c0_3 = arith.constant 0 : index
    %c0_4 = arith.constant 0 : index
    %3 = vector.load %arg3[%c0_3, %c0_4] : memref<1x128xf32, #tpu.memory_space<vmem>>, vector<1x128xf32>
    %4 = vector.broadcast %3 : vector<1x128xf32> to vector<16x128xf32>
    %5 = arith.addf %2, %4 : vector<16x128xf32>
    %cst_5 = arith.constant 0.000000e+00 : f32
    %6 = vector.broadcast %cst_5 : f32 to vector<16x128xf32>
    %7 = arith.maximumf %5, %6 : vector<16x128xf32>
    %8 = arith.truncf %7 : vector<16x128xf32> to vector<16x128xbf16>
    %c0_6 = arith.constant 0 : index
    %c0_7 = arith.constant 0 : index
    %9 = vector.load %arg4[%c0_6, %c0_7] : memref<128x128xbf16, #tpu.memory_space<vmem>>, vector<128x128xbf16>
    %cst_8 = arith.constant dense<0.000000e+00> : vector<16x128xf32>
    %10 = tpu.matmul %8, %9, %cst_8 {dimension_numbers = #tpu.dot_dimension_numbers<[1], [0], [0], [1], [0, 0, 1, 1], [], []>} : vector<16x128xbf16>, vector<128x128xbf16>, vector<16x128xf32> -> vector<16x128xf32>
    %c0_9 = arith.constant 0 : index
    %c0_10 = arith.constant 0 : index
    %11 = vector.load %arg5[%c0_9, %c0_10] : memref<1x128xf32, #tpu.memory_space<vmem>>, vector<1x128xf32>
    %12 = vector.broadcast %11 : vector<1x128xf32> to vector<16x128xf32>
    %13 = arith.addf %10, %12 : vector<16x128xf32>
    %c0_11 = arith.constant 0 : index
    %c0_12 = arith.constant 0 : index
    %14 = vector.load %arg6[%c0_11, %c0_12] : memref<16x128xf32, #tpu.memory_space<vmem>>, vector<16x128xf32>
    tpu.vector_store %arg6[%c0_11, %c0_12], %13 {strides = array<i32>} : memref<16x128xf32, #tpu.memory_space<vmem>>, vector<16x128xf32>,
    return
  }
  func.func @transform_0(%arg0: i32) -> (i32, i32) {
    %c0_i32 = arith.constant 0 : i32
    %c0_i32_0 = arith.constant 0 : i32
    return %arg0, %c0_i32 : i32, i32
  }
  func.func @transform_1(%arg0: i32) -> (i32, i32) {
    %c0_i32 = arith.constant 0 : i32
    %c0_i32_0 = arith.constant 0 : i32
    %c0_i32_1 = arith.constant 0 : i32
    return %c0_i32, %c0_i32_0 : i32, i32
  }
  func.func @transform_2(%arg0: i32) -> (i32, i32) {
    %c0_i32 = arith.constant 0 : i32
    %c0_i32_0 = arith.constant 0 : i32
    %c0_i32_1 = arith.constant 0 : i32
    return %c0_i32, %c0_i32_0 : i32, i32
  }
  func.func @transform_3(%arg0: i32) -> (i32, i32) {
    %c0_i32 = arith.constant 0 : i32
    %c0_i32_0 = arith.constant 0 : i32
    %c0_i32_1 = arith.constant 0 : i32
    return %c0_i32, %c0_i32_0 : i32, i32
  }
  func.func @transform_4(%arg0: i32) -> (i32, i32) {
    %c0_i32 = arith.constant 0 : i32
    %c0_i32_0 = arith.constant 0 : i32
    %c0_i32_1 = arith.constant 0 : i32
    return %c0_i32, %c0_i32_0 : i32, i32
  }
  func.func @transform_5(%arg0: i32) -> (i32, i32) {
    %c0_i32 = arith.constant 0 : i32
    %c0_i32_0 = arith.constant 0 : i32
    return %arg0, %c0_i32 : i32, i32
  }
}

</mosaic_0001>

<llo_original>
// kernel: tpu_custom_call.1
$region0: #{tpu_custom_call.1}
  #allocation0 [shape = 'u32[]', space=smem, size = 0x4, offset = 0x4, fixed_abs, tag = 'smem constant byte address 0x4 - core index']
  #allocation1 [shape = 'u32[72,128]{1,0:T(1,128)}', space=vmem, size = 0x9000, scoped, tag = 'internal scratch']
  %s0 = inlined_call_operand.hbm [shape: bf16[16,128], index: 0, kind: input, shape index: {}]
  %s1 = inlined_call_operand.hbm [shape: bf16[128,128], index: 1, kind: input, shape index: {}]
  %s2 = inlined_call_operand.vmem [shape: f32[1,128], index: 2, kind: input, shape index: {}]
  %s3 = inlined_call_operand.hbm [shape: bf16[128,128], index: 3, kind: input, shape index: {}]
  %s4 = inlined_call_operand.vmem [shape: f32[1,128], index: 4, kind: input, shape index: {}]
  %s5 = inlined_call_operand.hbm [shape: f32[16,128], index: 5, kind: output, shape index: {}]
  %s6 = sld [smem:[#allocation0]]
  $region42: #{tpu_custom_call.1} parent=0
    _
  %s8 = ssub.s32 1, %s6
  %s9 = scalar_select 0, %s8, %s6
  $region1: #{tpu_custom_call.1} parent=0
    #allocation2 [shape = 'u8[4096]{0}', space=vmem, size = 0x1000, scoped, tag = 'input window, operand 0, single buffered']
    #allocation3 [shape = 's32[1]{0}', space=sflag, size = 0x4, scoped, tag = 'scoped memory for tpu_custom_call.1']
    #allocation4 [shape = 's32[1]{0}', space=sflag, size = 0x4, scoped, tag = 'scoped memory for tpu_custom_call.1']
    #allocation5 [shape = 'u8[32768]{0}', space=vmem, size = 0x8000, scoped, tag = 'input window, operand 1, single buffered']
    #allocation6 [shape = 's32[1]{0}', space=sflag, size = 0x4, scoped, tag = 'scoped memory for tpu_custom_call.1']
    #allocation7 [shape = 'u8[32768]{0}', space=vmem, size = 0x8000, scoped, tag = 'input window, operand 3, single buffered']
    #allocation8 [shape = 'u8[8192]{0}', space=vmem, size = 0x2000, scoped, tag = 'output window, operand 0, single buffered']
    %10 = vsyncpa [#allocation3], 0
    %11 = vsyncpa [#allocation6], 0
    %12 = vsyncpa [#allocation4], 0
    // Predicated region
    $region2: #{tpu_custom_call.1} parent=1 // pred_check
      _
    $region3: #{tpu_custom_call.1} parent=1 // pred_check_branch
      %14 = sbr.rel (0) target = $region5
    $region4: #{tpu_custom_call.1} parent=1 // pred_region
      %16 = vsyncadd [#allocation3], 0
      %s17 = sshll.u32 %s0, 4
      %s18 = int_to_ptr.hbm [resolvable:$true] %s17
      %s19 = sshll.u32 [#allocation2], 4
      %s20 = int_to_ptr.vmem [resolvable:$true] %s19
      %25 = dma.hbm_to_vmem [thread:$0]  %s18, 128, %s20, [#allocation3], 64, 64, 4
    $region5: #{tpu_custom_call.1} parent=1 // pred_fallthru
      _
    // Predicated region
    $region6: #{tpu_custom_call.1} parent=1 // pred_check
      _
    $region7: #{tpu_custom_call.1} parent=1 // pred_check_branch
      %27 = sbr.rel (0) target = $region9
    $region8: #{tpu_custom_call.1} parent=1 // pred_region
      %29 = vsyncadd [#allocation6], 0
      %s30 = sshll.u32 %s1, 4
      %s31 = int_to_ptr.hbm [resolvable:$true] %s30
      %s32 = sshll.u32 [#allocation5], 4
      %s33 = int_to_ptr.vmem [resolvable:$true] %s32
      %38 = dma.hbm_to_vmem [thread:$0]  %s31, 1024, %s33, [#allocation6], 64, 64, 4
    $region9: #{tpu_custom_call.1} parent=1 // pred_fallthru
      _
    // Predicated region
    $region10: #{tpu_custom_call.1} parent=1 // pred_check
      _
    $region11: #{tpu_custom_call.1} parent=1 // pred_check_branch
      %40 = sbr.rel (0) target = $region13
    $region12: #{tpu_custom_call.1} parent=1 // pred_region
      _
    $region13: #{tpu_custom_call.1} parent=1 // pred_fallthru
      _
    // Predicated region
    $region14: #{tpu_custom_call.1} parent=1 // pred_check
      _
    $region15: #{tpu_custom_call.1} parent=1 // pred_check_branch
      %42 = sbr.rel (0) target = $region17
    $region16: #{tpu_custom_call.1} parent=1 // pred_region
      %44 = vsyncadd [#allocation6], 0
      %s45 = sshll.u32 %s3, 4
      %s46 = int_to_ptr.hbm [resolvable:$true] %s45
      %s47 = sshll.u32 [#allocation7], 4
      %s48 = int_to_ptr.vmem [resolvable:$true] %s47
      %53 = dma.hbm_to_vmem [thread:$0]  %s46, 1024, %s48, [#allocation6], 64, 64, 4
    $region17: #{tpu_custom_call.1} parent=1 // pred_fallthru
      _
    // Predicated region
    $region18: #{tpu_custom_call.1} parent=1 // pred_check
      _
    $region19: #{tpu_custom_call.1} parent=1 // pred_check_branch
      %55 = sbr.rel (0) target = $region21
    $region20: #{tpu_custom_call.1} parent=1 // pred_region
      _
    $region21: #{tpu_custom_call.1} parent=1 // pred_fallthru
      _
    // Predicated region
    $region22: #{tpu_custom_call.1} parent=1 // pred_check
      _
    $region23: #{tpu_custom_call.1} parent=1 // pred_check_branch
      %57 = sbr.rel (0) target = $region25
    $region24: #{tpu_custom_call.1} parent=1 // pred_region
      %59 = dma.done [#allocation3], 128
    $region25: #{tpu_custom_call.1} parent=1 // pred_fallthru
      _
    // Predicated region
    $region26: #{tpu_custom_call.1} parent=1 // pred_check
      _
    $region27: #{tpu_custom_call.1} parent=1 // pred_check_branch
      %61 = sbr.rel (0) target = $region29
    $region28: #{tpu_custom_call.1} parent=1 // pred_region
      %63 = dma.done [#allocation6], 1024
    $region29: #{tpu_custom_call.1} parent=1 // pred_fallthru
      _
    // Predicated region
    $region30: #{tpu_custom_call.1} parent=1 // pred_check
      _
    $region31: #{tpu_custom_call.1} parent=1 // pred_check_branch
      %65 = sbr.rel (0) target = $region33
    $region32: #{tpu_custom_call.1} parent=1 // pred_region
      %67 = dma.done [#allocation6], 1024
    $region33: #{tpu_custom_call.1} parent=1 // pred_fallthru
      _
    %v68 = vld [vmem:[#allocation2] sm:$0xf]
    %v69 = vld [vmem:[#allocation2 + $0x4] sm:$0xf]
    %v70 = vld [vmem:[#allocation5] sm:$0xf]
    %v71 = vld [vmem:[#allocation5 + $0x4] sm:$0xf]
    %v72 = vld [vmem:[#allocation5 + $0x8] sm:$0xf]
    %v73 = vld [vmem:[#allocation5 + $0xc] sm:$0xf]
    %v74 = vld [vmem:[#allocation5 + $0x10] sm:$0xf]
    %v75 = vld [vmem:[#allocation5 + $0x14] sm:$0xf]
    %v76 = vld [vmem:[#allocation5 + $0x18] sm:$0xf]
    %v77 = vld [vmem:[#allocation5 + $0x1c] sm:$0xf]
    %v78 = vld [vmem:[#allocation5 + $0x20] sm:$0xf]
    %v79 = vld [vmem:[#allocation5 + $0x24] sm:$0xf]
    %v80 = vld [vmem:[#allocation5 + $0x28] sm:$0xf]
    %v81 = vld [vmem:[#allocation5 + $0x2c] sm:$0xf]
    %v82 = vld [vmem:[#allocation5 + $0x30] sm:$0xf]
    %v83 = vld [vmem:[#allocation5 + $0x34] sm:$0xf]
    %v84 = vld [vmem:[#allocation5 + $0x38] sm:$0xf]
    %v85 = vld [vmem:[#allocation5 + $0x3c] sm:$0xf]
    %v86 = vld [vmem:[%s2] sm:$0x1]
    %v88 = vperm.slane %v86, 0
    %v92 = vunpack.c.l.b16 %v68
    %v93 = vunpack.c.l.b16 %v69
    %v94 = vpack.c.b16 %v93, %v92
    %v112 = vunpack.c.l.b16 %v70
    %v113 = vunpack.c.l.b16 %v71
    %v114 = vunpack.c.l.b16 %v72
    %v115 = vunpack.c.l.b16 %v73
    %v116 = vunpack.c.l.b16 %v74
    %v117 = vunpack.c.l.b16 %v75
    %v118 = vunpack.c.l.b16 %v76
    %v119 = vunpack.c.l.b16 %v77
    %v120 = vunpack.c.l.b16 %v78
    %v121 = vunpack.c.l.b16 %v79
    %v122 = vunpack.c.l.b16 %v80
    %v123 = vunpack.c.l.b16 %v81
    %v124 = vunpack.c.l.b16 %v82
    %v125 = vunpack.c.l.b16 %v83
    %v126 = vunpack.c.l.b16 %v84
    %v127 = vunpack.c.l.b16 %v85
    %v128 = vpack.c.b16 %v113, %v112
    %v129 = vpack.c.b16 %v115, %v114
    %v130 = vpack.c.b16 %v117, %v116
    %v131 = vpack.c.b16 %v119, %v118
    %v132 = vpack.c.b16 %v121, %v120
    %v133 = vpack.c.b16 %v123, %v122
    %v134 = vpack.c.b16 %v125, %v124
    %v135 = vpack.c.b16 %v127, %v126
    %144 = vmatpush.bf16.msra.mxu0 %v135
    %145 = vmatpush.bf16.msra.mxu0 %v134
    %146 = vmatpush.bf16.msra.mxu0 %v133
    %147 = vmatpush.bf16.msra.mxu0 %v132
    %148 = vmatpush.bf16.msra.mxu0 %v131
    %149 = vmatpush.bf16.msra.mxu0 %v130
    %150 = vmatpush.bf16.msra.mxu0 %v129
    %151 = vmatpush.bf16.msra.mxu0 %v128
    %152 = vmatmul.bf16.gmra.mxu0 %v94
    %v153 = vpop.f32.mrf.mxu0
    %v154 = vadd.f32 %v88, %v153
    %v155 = vpop.f32.mrf.mxu0
    %v156 = vadd.f32 %v88, %v155
    %157 = vdwg.mxu0
    %v158 = vmax.f32 %v154, 0.0
    %v159 = vmax.f32 %v156, 0.0
    %v160 = vpack.c.bf16 %v159, %v158
    %v161 = vld [vmem:[#allocation7] sm:$0xf]
    %v162 = vld [vmem:[#allocation7 + $0x4] sm:$0xf]
    %v163 = vld [vmem:[#allocation7 + $0x8] sm:$0xf]
    %v164 = vld [vmem:[#allocation7 + $0xc] sm:$0xf]
    %v165 = vld [vmem:[#allocation7 + $0x10] sm:$0xf]
    %v166 = vld [vmem:[#allocation7 + $0x14] sm:$0xf]
    %v167 = vld [vmem:[#allocation7 + $0x18] sm:$0xf]
    %v168 = vld [vmem:[#allocation7 + $0x1c] sm:$0xf]
    %v169 = vld [vmem:[#allocation7 + $0x20] sm:$0xf]
    %v170 = vld [vmem:[#allocation7 + $0x24] sm:$0xf]
    %v171 = vld [vmem:[#allocation7 + $0x28] sm:$0xf]
    %v172 = vld [vmem:[#allocation7 + $0x2c] sm:$0xf]
    %v173 = vld [vmem:[#allocation7 + $0x30] sm:$0xf]
    %v174 = vld [vmem:[#allocation7 + $0x34] sm:$0xf]
    %v175 = vld [vmem:[#allocation7 + $0x38] sm:$0xf]
    %v176 = vld [vmem:[#allocation7 + $0x3c] sm:$0xf]
    %v177 = vld [vmem:[%s4] sm:$0x1]
    %v179 = vperm.slane %v177, 0
    %v197 = vunpack.c.l.b16 %v161
    %v198 = vunpack.c.l.b16 %v162
    %v199 = vunpack.c.l.b16 %v163
    %v200 = vunpack.c.l.b16 %v164
    %v201 = vunpack.c.l.b16 %v165
    %v202 = vunpack.c.l.b16 %v166
    %v203 = vunpack.c.l.b16 %v167
    %v204 = vunpack.c.l.b16 %v168
    %v205 = vunpack.c.l.b16 %v169
    %v206 = vunpack.c.l.b16 %v170
    %v207 = vunpack.c.l.b16 %v171
    %v208 = vunpack.c.l.b16 %v172
    %v209 = vunpack.c.l.b16 %v173
    %v210 = vunpack.c.l.b16 %v174
    %v211 = vunpack.c.l.b16 %v175
    %v212 = vunpack.c.l.b16 %v176
    %v213 = vpack.c.b16 %v198, %v197
    %v214 = vpack.c.b16 %v200, %v199
    %v215 = vpack.c.b16 %v202, %v201
    %v216 = vpack.c.b16 %v204, %v203
    %v217 = vpack.c.b16 %v206, %v205
    %v218 = vpack.c.b16 %v208, %v207
    %v219 = vpack.c.b16 %v210, %v209
    %v220 = vpack.c.b16 %v212, %v211
    %229 = vmatpush.bf16.msra.mxu0 %v220
    %230 = vmatpush.bf16.msra.mxu0 %v219
    %231 = vmatpush.bf16.msra.mxu0 %v218
    %232 = vmatpush.bf16.msra.mxu0 %v217
    %233 = vmatpush.bf16.msra.mxu0 %v216
    %234 = vmatpush.bf16.msra.mxu0 %v215
    %235 = vmatpush.bf16.msra.mxu0 %v214
    %236 = vmatpush.bf16.msra.mxu0 %v213
    %237 = vmatmul.bf16.gmra.mxu0 %v160
    %v238 = vpop.f32.mrf.mxu0
    %v239 = vadd.f32 %v179, %v238
    %v240 = vpop.f32.mrf.mxu0
    %v241 = vadd.f32 %v179, %v240
    %242 = vdwg.mxu0
    %243 = vst [vmem:[#allocation8] sm:$0xff] %v239
    %244 = vst [vmem:[#allocation8 + $0x8] sm:$0xff] %v241
    // Predicated region
    $region34: #{tpu_custom_call.1} parent=1 // pred_check
      _
    $region35: #{tpu_custom_call.1} parent=1 // pred_check_branch
      %246 = sbr.rel (0) target = $region37
    $region36: #{tpu_custom_call.1} parent=1 // pred_region
      %248 = vsyncadd [#allocation4], 0
      %s249 = sshll.u32 [#allocation8], 4
      %s250 = int_to_ptr.vmem [resolvable:$true] %s249
      %s251 = sshll.u32 %s5, 4
      %s252 = int_to_ptr.hbm [resolvable:$true] %s251
      %257 = dma.vmem_to_hbm [thread:$0]  %s250, 256, %s252, [#allocation4], 128, 128, 8
    $region37: #{tpu_custom_call.1} parent=1 // pred_fallthru
      _
    // Predicated region
    $region38: #{tpu_custom_call.1} parent=1 // pred_check
      _
    $region39: #{tpu_custom_call.1} parent=1 // pred_check_branch
      %259 = sbr.rel (0) target = $region41
    $region40: #{tpu_custom_call.1} parent=1 // pred_region
      %261 = dma.done [#allocation4], 256
    $region41: #{tpu_custom_call.1} parent=1 // pred_fallthru
      _
    %262 = vsyncpa [#allocation3], 1
    %263 = vsyncpa [#allocation6], 1
    %264 = vsyncpa [#allocation4], 1

</llo_original>
